<compile_context>
chip_gen: v5e
topology: v5e:2x2
jax: 0.10.0
libtpu: 0.0.40
codegen_flags: <defaults>
</compile_context>

<pallas_src>
import jax
import jax.numpy as jnp
from jax.experimental import pallas as pl
from jax.experimental.pallas import tpu as pltpu

_SUBLANE = 16  # conservative sublane multiple (covers f32 and bf16 packing)


def _round_up(x, m):
    return ((x + m - 1) // m) * m


def qfunction_kernel(x_ref, w1_ref, b1_ref, w2_ref, b2_ref, w3_ref, b3_ref,
                     out_ref):
    # In-kernel bf16 cast of the streamed f32 states (VPU slack is huge).
    x = x_ref[...].astype(jnp.bfloat16)
    # layer 1: Linear(state_dim, 64) + ReLU  (bf16 operands, f32 accumulate)
    h = jnp.dot(x, w1_ref[...], preferred_element_type=jnp.float32)
    h = jnp.maximum(h + b1_ref[...], 0.0)
    # layer 2: Linear(64, 64) + ReLU
    h = jnp.dot(h.astype(jnp.bfloat16), w2_ref[...],
                preferred_element_type=jnp.float32)
    h = jnp.maximum(h + b2_ref[...], 0.0)
    # layer 3: Linear(64, action_dim) — narrow (action_dim-wide) f32 store.
    a = jnp.dot(h.astype(jnp.bfloat16), w3_ref[...],
                preferred_element_type=jnp.float32)
    out_ref[...] = a + b3_ref[...]


def _choose_batch_tile(B, tile_batch):
    """Pick a batch tile: multiple of 16, <= tile_batch, and (when possible)
    <= half the padded batch so the grid has >= 2 steps for v7x's two TCs."""
    b16 = _round_up(max(B, 1), _SUBLANE)
    half = _round_up(pl.cdiv(b16, 2), _SUBLANE)
    tb = max(_SUBLANE, min(_round_up(tile_batch, _SUBLANE), half))
    return tb


def qfunction_forward(states, params, *, tile_batch=4096):
    """states: [B, state_dim] f32; params: dict of (w1,b1,w2,b2,w3,b3).

    Weights are stored [in, out] (transposed vs. PyTorch nn.Linear), biases
    are [1, out].  Returns [B, action_dim] f32.
    """
    w1, b1 = params["w1"], params["b1"]
    w2, b2 = params["w2"], params["b2"]
    w3, b3 = params["w3"], params["b3"]

    B, state_dim = states.shape
    action_dim = w3.shape[1]

    # Batch tiling: tb rows per grid step; pad B up to a multiple of tb.
    tb = _choose_batch_tile(B, tile_batch)
    b_pad = _round_up(B, tb)
    if b_pad != B:
        states = jnp.pad(states, ((0, b_pad - B), (0, 0)))
    grid = (b_pad // tb,)

    # Weights to bf16 once (tiny, one-time); biases stay f32.
    w1_bf = w1.astype(jnp.bfloat16)
    w2_bf = w2.astype(jnp.bfloat16)
    w3_bf = w3.astype(jnp.bfloat16)

    # Weights/biases: constant index_map -> DMA'd once, VMEM-resident.
    # (Working set is ~50 KiB, orders of magnitude below any VMEM budget,
    #  so no Buffered(1) tweak needed.)
    resident = lambda arr: pl.BlockSpec(arr.shape, lambda i: (0, 0))

    out = pl.pallas_call(
        qfunction_kernel,
        out_shape=jax.ShapeDtypeStruct((b_pad, action_dim), jnp.float32),
        grid_spec=pltpu.PrefetchScalarGridSpec(
            num_scalar_prefetch=0,
            grid=grid,
            in_specs=[
                pl.BlockSpec((tb, state_dim), lambda i: (i, 0)),  # streamed f32
                resident(w1_bf), resident(b1),
                resident(w2_bf), resident(b2),
                resident(w3_bf), resident(b3),
            ],
            out_specs=pl.BlockSpec((tb, action_dim), lambda i: (i, 0)),
        ),
        compiler_params=pltpu.CompilerParams(
            dimension_semantics=("parallel",),   # v7x: shard tiles over 2 TCs
            vmem_limit_bytes=32 * 1024 * 1024,
        ),
    )(states, w1_bf, b1, w2_bf, b2, w3_bf, b3)

    return out[:B] if b_pad != B else out


def init_qfunction_params(key, state_dim, action_dim, hidden=64):
    """Deterministic init matching nn.Linear's default U(-1/sqrt(in), 1/sqrt(in)).
    Weights stored [in, out] (transposed vs. PyTorch)."""
    ks = jax.random.split(key, 6)

    def layer(kw, kb, fan_in, fan_out):
        bound = 1.0 / jnp.sqrt(jnp.float32(fan_in))
        w = jax.random.uniform(kw, (fan_in, fan_out), jnp.float32,
                               minval=-bound, maxval=bound)
        b = jax.random.uniform(kb, (1, fan_out), jnp.float32,
                               minval=-bound, maxval=bound)
        return w, b

    w1, b1 = layer(ks[0], ks[1], state_dim, hidden)
    w2, b2 = layer(ks[2], ks[3], hidden, hidden)
    w3, b3 = layer(ks[4], ks[5], hidden, action_dim)
    return {"w1": w1, "b1": b1, "w2": w2, "b2": b2, "w3": w3, "b3": b3}


def qfunction_reference(states, params):
    """Same numerics as the kernel: bf16 matmul operands, f32 accumulation."""
    bf = jnp.bfloat16
    h = jnp.dot(states.astype(bf), params["w1"].astype(bf),
                preferred_element_type=jnp.float32) + params["b1"]
    h = jnp.maximum(h, 0.0)
    h = jnp.dot(h.astype(bf), params["w2"].astype(bf),
                preferred_element_type=jnp.float32) + params["b2"]
    h = jnp.maximum(h, 0.0)
    return jnp.dot(h.astype(bf), params["w3"].astype(bf),
                   preferred_element_type=jnp.float32) + params["b3"]


if __name__ == "__main__":
    key = jax.random.PRNGKey(0)
    k_params, k_states = jax.random.split(key)

    batch = 1000       # deliberately NOT a multiple of the batch tile
    state_dim = 4      # e.g. CartPole-like state
    action_dim = 2

    params = init_qfunction_params(k_params, state_dim, action_dim)
    states = jax.random.normal(k_states, (batch, state_dim), jnp.float32)

    actions = qfunction_forward(states, params)
    actions = jax.block_until_ready(actions)
    assert actions.shape == (batch, action_dim)

    # Check against a reference using the same bf16-in / f32-acc math.
    ref = qfunction_reference(states, params)
    assert jnp.allclose(actions, ref, atol=1e-3, rtol=1e-3), (
        float(jnp.max(jnp.abs(actions - ref))))

    # Loose sanity check against full-f32 math (bf16 operand rounding only).
    h = jnp.maximum(states @ params["w1"] + params["b1"], 0.0)
    h = jnp.maximum(h @ params["w2"] + params["b2"], 0.0)
    ref_f32 = h @ params["w3"] + params["b3"]
    assert jnp.allclose(actions, ref_f32, atol=1e-1, rtol=1e-1)

    print("KERNEL_OK")
</pallas_src>

<mosaic_0001>
module attributes {stable_mosaic.version = 11 : i64} {
  func.func @qfunction_kernel(%arg0: i32, %arg1: memref<512x4xf32, #tpu.memory_space<vmem>>, %arg2: memref<4x64xbf16, #tpu.memory_space<vmem>>, %arg3: memref<1x64xf32, #tpu.memory_space<vmem>>, %arg4: memref<64x64xbf16, #tpu.memory_space<vmem>>, %arg5: memref<1x64xf32, #tpu.memory_space<vmem>>, %arg6: memref<64x2xbf16, #tpu.memory_space<vmem>>, %arg7: memref<1x2xf32, #tpu.memory_space<vmem>>, %arg8: memref<512x2xf32, #tpu.memory_space<vmem>>) attributes {dimension_semantics = [#tpu.dimension_semantics<parallel>], iteration_bounds = array<i64: 2>, scalar_prefetch = 0 : i64, scratch_operands = 0 : i64, tpu.core_type = #tpu.core_type<tc>, window_params = [{transform_indices = @transform_0, window_bounds = array<i64: 512, 4>}, {pipeline_mode = #tpu.pipeline_mode<synchronous>, transform_indices = @transform_1, window_bounds = array<i64: 4, 64>}, {pipeline_mode = #tpu.pipeline_mode<synchronous>, transform_indices = @transform_2, window_bounds = array<i64: 1, 64>}, {pipeline_mode = #tpu.pipeline_mode<synchronous>, transform_indices = @transform_3, window_bounds = array<i64: 64, 64>}, {pipeline_mode = #tpu.pipeline_mode<synchronous>, transform_indices = @transform_4, window_bounds = array<i64: 1, 64>}, {pipeline_mode = #tpu.pipeline_mode<synchronous>, transform_indices = @transform_5, window_bounds = array<i64: 64, 2>}, {pipeline_mode = #tpu.pipeline_mode<synchronous>, transform_indices = @transform_6, window_bounds = array<i64: 1, 2>}, {transform_indices = @transform_7, window_bounds = array<i64: 512, 2>}]} {
    %c0 = arith.constant 0 : index
    %c0_0 = arith.constant 0 : index
    %0 = vector.load %arg1[%c0, %c0_0] : memref<512x4xf32, #tpu.memory_space<vmem>>, vector<512x4xf32>
    %1 = arith.truncf %0 : vector<512x4xf32> to vector<512x4xbf16>
    %c0_1 = arith.constant 0 : index
    %c0_2 = arith.constant 0 : index
    %2 = vector.load %arg2[%c0_1, %c0_2] : memref<4x64xbf16, #tpu.memory_space<vmem>>, vector<4x64xbf16>
    %cst = arith.constant dense<0.000000e+00> : vector<512x64xf32>
    %3 = tpu.matmul %1, %2, %cst {dimension_numbers = #tpu.dot_dimension_numbers<[1], [0], [0], [1], [0, 0, 1, 1], [], []>} : vector<512x4xbf16>, vector<4x64xbf16>, vector<512x64xf32> -> vector<512x64xf32>
    %c0_3 = arith.constant 0 : index
    %c0_4 = arith.constant 0 : index
    %4 = vector.load %arg3[%c0_3, %c0_4] : memref<1x64xf32, #tpu.memory_space<vmem>>, vector<1x64xf32>
    %5 = vector.broadcast %4 : vector<1x64xf32> to vector<512x64xf32>
    %6 = arith.addf %3, %5 : vector<512x64xf32>
    %cst_5 = arith.constant 0.000000e+00 : f32
    %7 = vector.broadcast %cst_5 : f32 to vector<512x64xf32>
    %8 = arith.maximumf %6, %7 : vector<512x64xf32>
    %9 = arith.truncf %8 : vector<512x64xf32> to vector<512x64xbf16>
    %c0_6 = arith.constant 0 : index
    %c0_7 = arith.constant 0 : index
    %10 = vector.load %arg4[%c0_6, %c0_7] : memref<64x64xbf16, #tpu.memory_space<vmem>>, vector<64x64xbf16>
    %cst_8 = arith.constant dense<0.000000e+00> : vector<512x64xf32>
    %11 = tpu.matmul %9, %10, %cst_8 {dimension_numbers = #tpu.dot_dimension_numbers<[1], [0], [0], [1], [0, 0, 1, 1], [], []>} : vector<512x64xbf16>, vector<64x64xbf16>, vector<512x64xf32> -> vector<512x64xf32>
    %c0_9 = arith.constant 0 : index
    %c0_10 = arith.constant 0 : index
    %12 = vector.load %arg5[%c0_9, %c0_10] : memref<1x64xf32, #tpu.memory_space<vmem>>, vector<1x64xf32>
    %13 = vector.broadcast %12 : vector<1x64xf32> to vector<512x64xf32>
    %14 = arith.addf %11, %13 : vector<512x64xf32>
    %cst_11 = arith.constant 0.000000e+00 : f32
    %15 = vector.broadcast %cst_11 : f32 to vector<512x64xf32>
    %16 = arith.maximumf %14, %15 : vector<512x64xf32>
    %17 = arith.truncf %16 : vector<512x64xf32> to vector<512x64xbf16>
    %c0_12 = arith.constant 0 : index
    %c0_13 = arith.constant 0 : index
    %18 = vector.load %arg6[%c0_12, %c0_13] : memref<64x2xbf16, #tpu.memory_space<vmem>>, vector<64x2xbf16>
    %cst_14 = arith.constant dense<0.000000e+00> : vector<512x2xf32>
    %19 = tpu.matmul %17, %18, %cst_14 {dimension_numbers = #tpu.dot_dimension_numbers<[1], [0], [0], [1], [0, 0, 1, 1], [], []>} : vector<512x64xbf16>, vector<64x2xbf16>, vector<512x2xf32> -> vector<512x2xf32>
    %c0_15 = arith.constant 0 : index
    %c0_16 = arith.constant 0 : index
    %20 = vector.load %arg7[%c0_15, %c0_16] : memref<1x2xf32, #tpu.memory_space<vmem>>, vector<1x2xf32>
    %21 = vector.broadcast %20 : vector<1x2xf32> to vector<512x2xf32>
    %22 = arith.addf %19, %21 : vector<512x2xf32>
    %c0_17 = arith.constant 0 : index
    %c0_18 = arith.constant 0 : index
    %23 = vector.load %arg8[%c0_17, %c0_18] : memref<512x2xf32, #tpu.memory_space<vmem>>, vector<512x2xf32>
    tpu.vector_store %arg8[%c0_17, %c0_18], %22 {strides = array<i32>} : memref<512x2xf32, #tpu.memory_space<vmem>>, vector<512x2xf32>,
    return
  }
  func.func @transform_0(%arg0: i32) -> (i32, i32) {
    %c0_i32 = arith.constant 0 : i32
    %c0_i32_0 = arith.constant 0 : i32
    return %arg0, %c0_i32 : i32, i32
  }
  func.func @transform_1(%arg0: i32) -> (i32, i32) {
    %c0_i32 = arith.constant 0 : i32
    %c0_i32_0 = arith.constant 0 : i32
    %c0_i32_1 = arith.constant 0 : i32
    return %c0_i32, %c0_i32_0 : i32, i32
  }
  func.func @transform_2(%arg0: i32) -> (i32, i32) {
    %c0_i32 = arith.constant 0 : i32
    %c0_i32_0 = arith.constant 0 : i32
    %c0_i32_1 = arith.constant 0 : i32
    return %c0_i32, %c0_i32_0 : i32, i32
  }
  func.func @transform_3(%arg0: i32) -> (i32, i32) {
    %c0_i32 = arith.constant 0 : i32
    %c0_i32_0 = arith.constant 0 : i32
    %c0_i32_1 = arith.constant 0 : i32
    return %c0_i32, %c0_i32_0 : i32, i32
  }
  func.func @transform_4(%arg0: i32) -> (i32, i32) {
    %c0_i32 = arith.constant 0 : i32
    %c0_i32_0 = arith.constant 0 : i32
    %c0_i32_1 = arith.constant 0 : i32
    return %c0_i32, %c0_i32_0 : i32, i32
  }
  func.func @transform_5(%arg0: i32) -> (i32, i32) {
    %c0_i32 = arith.constant 0 : i32
    %c0_i32_0 = arith.constant 0 : i32
    %c0_i32_1 = arith.constant 0 : i32
    return %c0_i32, %c0_i32_0 : i32, i32
  }
  func.func @transform_6(%arg0: i32) -> (i32, i32) {
    %c0_i32 = arith.constant 0 : i32
    %c0_i32_0 = arith.constant 0 : i32
    %c0_i32_1 = arith.constant 0 : i32
    return %c0_i32, %c0_i32_0 : i32, i32
  }
  func.func @transform_7(%arg0: i32) -> (i32, i32) {
    %c0_i32 = arith.constant 0 : i32
    %c0_i32_0 = arith.constant 0 : i32
    return %arg0, %c0_i32 : i32, i32
  }
}

</mosaic_0001>

<llo_original>
// kernel: tpu_custom_call.1
$region0: #{tpu_custom_call.1}
  #allocation0 [shape = 'u32[]', space=smem, size = 0x4, offset = 0x4, fixed_abs, tag = 'smem constant byte address 0x4 - core index']
  #allocation1 [shape = 'u32[72,128]{1,0:T(1,128)}', space=vmem, size = 0x9000, scoped, tag = 'internal scratch']
  %s0 = inlined_call_operand.vmem [shape: f32[1024,4], index: 0, kind: input, shape index: {}]
  %s1 = inlined_call_operand.vmem [shape: bf16[4,64], index: 1, kind: input, shape index: {}]
  %s2 = inlined_call_operand.vmem [shape: f32[1,64], index: 2, kind: input, shape index: {}]
  %s3 = inlined_call_operand.vmem [shape: bf16[64,64], index: 3, kind: input, shape index: {}]
  %s4 = inlined_call_operand.vmem [shape: f32[1,64], index: 4, kind: input, shape index: {}]
  %s5 = inlined_call_operand.vmem [shape: bf16[64,2], index: 5, kind: input, shape index: {}]
  %s6 = inlined_call_operand.vmem [shape: f32[1,2], index: 6, kind: input, shape index: {}]
  %s7 = inlined_call_operand.vmem [shape: f32[1024,2], index: 7, kind: output, shape index: {}]
  %s8 = sld [smem:[#allocation0]]
  $region61: #{tpu_custom_call.1} parent=0
    _
  %s10 = ssub.s32 1, %s8
  %s11 = scalar_select 0, %s10, %s8
  loop: start=0, step=1, limit=4
  $region2: #{tpu_custom_call.1} parent=0 // loop_pre_header
    _
  $region3: #{tpu_custom_call.1} parent=0 // loop_header
    %s13 = sphi 0, %s17
    %p14 = scmp.ge.s32.totalorder %s13, 4
    %s23 = sphi 0, %s25
    %s26 = sphi 0, %s23
    %s27 = sphi 0, %s26
    %s43 = sphi 0, %s27
    %s47 = sphi 0, %s47
    %s49 = sphi 0, %s47
    %s50 = sphi 0, %s49
    %s64 = sphi 0, %s50
    %s68 = sphi 0, %s68
    %s70 = sphi 0, %s68
    %s71 = sphi 0, %s70
    %s85 = sphi 0, %s71
    %s89 = sphi 0, %s89
    %s91 = sphi 0, %s89
    %s92 = sphi 0, %s91
    %s106 = sphi 0, %s92
    %s110 = sphi 0, %s110
    %s112 = sphi 0, %s110
    %s113 = sphi 0, %s112
    %s127 = sphi 0, %s113
    %s131 = sphi 0, %s131
    %s133 = sphi 0, %s131
    %s134 = sphi 0, %s133
    %s148 = sphi 0, %s134
    %s152 = sphi 0, %s152
    %s154 = sphi 0, %s152
    %s155 = sphi 0, %s154
    %s169 = sphi 0, %s155
    %s175 = sphi 0, %s177
    %s178 = sphi 0, %s175
    %s179 = sphi 0, %s178
    %s195 = sphi 0, %s179
  $region4: #{tpu_custom_call.1} parent=0 // loop_header_branch
    %16 = sbr.rel (%p14) target = $region8
  $region5: #{tpu_custom_call.1} parent=0 // loop_body
    %s18 = ssub.s32 %s13, 1
    %s19 = ssub.s32 %s13, 2
    %s20 = sadd.s32 %s13, 1
    %s21 = ssub.s32 %s13, %s20
    %p22 = scmp.eq.s32.totalorder %s21, 0
    %s24 = sadd.s32 %s23, 1
    %s25 = scalar_select %p22, %s23, %s24
    %p28 = pneg %p22
    %p29 = scmp.eq.s32.totalorder %s13, 1
    %p30 = por %p28, %p29
    %p31 = scmp.ne.s32.totalorder %s23, %s26
    %p32 = scmp.eq.s32.totalorder %s13, 0
    %p33 = por %p31, %p32
    %p34 = scmp.ne.s32.totalorder %s23, %s26
    %p35 = scmp.eq.s32.totalorder %s18, 1
    %p36 = por %p34, %p35
    %p37 = scmp.ne.s32.totalorder %s26, %s27
    %p38 = scmp.eq.s32.totalorder %s18, 0
    %p39 = por %p37, %p38
    %p40 = scmp.ne.s32.totalorder %s26, %s27
    %p41 = scmp.eq.s32.totalorder %s19, 1
    %p42 = por %p40, %p41
    %p44 = scmp.ne.s32.totalorder %s27, %s43
    %p45 = scmp.eq.s32.totalorder %s19, 0
    %p46 = por %p44, %p45
    %s48 = sadd.s32 %s47, 1
    %p51 = scmp.eq.s32.totalorder %s13, 1
    %p52 = scmp.ne.s32.totalorder %s47, %s49
    %p53 = scmp.eq.s32.totalorder %s13, 0
    %p54 = por %p52, %p53
    %p55 = scmp.ne.s32.totalorder %s47, %s49
    %p56 = scmp.eq.s32.totalorder %s18, 1
    %p57 = por %p55, %p56
    %p58 = scmp.ne.s32.totalorder %s49, %s50
    %p59 = scmp.eq.s32.totalorder %s18, 0
    %p60 = por %p58, %p59
    %p61 = scmp.ne.s32.totalorder %s49, %s50
    %p62 = scmp.eq.s32.totalorder %s19, 1
    %p63 = por %p61, %p62
    %p65 = scmp.ne.s32.totalorder %s50, %s64
    %p66 = scmp.eq.s32.totalorder %s19, 0
    %p67 = por %p65, %p66
    %s69 = sadd.s32 %s68, 1
    %p72 = scmp.eq.s32.totalorder %s13, 1
    %p73 = scmp.ne.s32.totalorder %s68, %s70
    %p74 = scmp.eq.s32.totalorder %s13, 0
    %p75 = por %p73, %p74
    %p76 = scmp.ne.s32.totalorder %s68, %s70
    %p77 = scmp.eq.s32.totalorder %s18, 1
    %p78 = por %p76, %p77
    %p79 = scmp.ne.s32.totalorder %s70, %s71
    %p80 = scmp.eq.s32.totalorder %s18, 0
    %p81 = por %p79, %p80
    %p82 = scmp.ne.s32.totalorder %s70, %s71
    %p83 = scmp.eq.s32.totalorder %s19, 1
    %p84 = por %p82, %p83
    %p86 = scmp.ne.s32.totalorder %s71, %s85
    %p87 = scmp.eq.s32.totalorder %s19, 0
    %p88 = por %p86, %p87
    %s90 = sadd.s32 %s89, 1
    %p93 = scmp.eq.s32.totalorder %s13, 1
    %p94 = scmp.ne.s32.totalorder %s89, %s91
    %p95 = scmp.eq.s32.totalorder %s13, 0
    %p96 = por %p94, %p95
    %p97 = scmp.ne.s32.totalorder %s89, %s91
    %p98 = scmp.eq.s32.totalorder %s18, 1
    %p99 = por %p97, %p98
    %p100 = scmp.ne.s32.totalorder %s91, %s92
    %p101 = scmp.eq.s32.totalorder %s18, 0
    %p102 = por %p100, %p101
    %p103 = scmp.ne.s32.totalorder %s91, %s92
    %p104 = scmp.eq.s32.totalorder %s19, 1
    %p105 = por %p103, %p104
    %p107 = scmp.ne.s32.totalorder %s92, %s106
    %p108 = scmp.eq.s32.totalorder %s19, 0
    %p109 = por %p107, %p108
    %s111 = sadd.s32 %s110, 1
    %p114 = scmp.eq.s32.totalorder %s13, 1
    %p115 = scmp.ne.s32.totalorder %s110, %s112
    %p116 = scmp.eq.s32.totalorder %s13, 0
    %p117 = por %p115, %p116
    %p118 = scmp.ne.s32.totalorder %s110, %s112
    %p119 = scmp.eq.s32.totalorder %s18, 1
    %p120 = por %p118, %p119
    %p121 = scmp.ne.s32.totalorder %s112, %s113
    %p122 = scmp.eq.s32.totalorder %s18, 0
    %p123 = por %p121, %p122
    %p124 = scmp.ne.s32.totalorder %s112, %s113
    %p125 = scmp.eq.s32.totalorder %s19, 1
    %p126 = por %p124, %p125
    %p128 = scmp.ne.s32.totalorder %s113, %s127
    %p129 = scmp.eq.s32.totalorder %s19, 0
    %p130 = por %p128, %p129
    %s132 = sadd.s32 %s131, 1
    %p135 = scmp.eq.s32.totalorder %s13, 1
    %p136 = scmp.ne.s32.totalorder %s131, %s133
    %p137 = scmp.eq.s32.totalorder %s13, 0
    %p138 = por %p136, %p137
    %p139 = scmp.ne.s32.totalorder %s131, %s133
    %p140 = scmp.eq.s32.totalorder %s18, 1
    %p141 = por %p139, %p140
    %p142 = scmp.ne.s32.totalorder %s133, %s134
    %p143 = scmp.eq.s32.totalorder %s18, 0
    %p144 = por %p142, %p143
    %p145 = scmp.ne.s32.totalorder %s133, %s134
    %p146 = scmp.eq.s32.totalorder %s19, 1
    %p147 = por %p145, %p146
    %p149 = scmp.ne.s32.totalorder %s134, %s148
    %p150 = scmp.eq.s32.totalorder %s19, 0
    %p151 = por %p149, %p150
    %s153 = sadd.s32 %s152, 1
    %p156 = scmp.eq.s32.totalorder %s13, 1
    %p157 = scmp.ne.s32.totalorder %s152, %s154
    %p158 = scmp.eq.s32.totalorder %s13, 0
    %p159 = por %p157, %p158
    %p160 = scmp.ne.s32.totalorder %s152, %s154
    %p161 = scmp.eq.s32.totalorder %s18, 1
    %p162 = por %p160, %p161
    %p163 = scmp.ne.s32.totalorder %s154, %s155
    %p164 = scmp.eq.s32.totalorder %s18, 0
    %p165 = por %p163, %p164
    %p166 = scmp.ne.s32.totalorder %s154, %s155
    %p167 = scmp.eq.s32.totalorder %s19, 1
    %p168 = por %p166, %p167
    %p170 = scmp.ne.s32.totalorder %s155, %s169
    %p171 = scmp.eq.s32.totalorder %s19, 0
    %p172 = por %p170, %p171
    %s173 = ssub.s32 %s13, %s20
    %p174 = scmp.eq.s32.totalorder %s173, 0
    %s176 = sadd.s32 %s175, 1
    %s177 = scalar_select %p174, %s175, %s176
    %p180 = pneg %p174
    %p181 = scmp.eq.s32.totalorder %s13, 1
    %p182 = por %p180, %p181
    %p183 = scmp.ne.s32.totalorder %s175, %s178
    %p184 = scmp.eq.s32.totalorder %s13, 0
    %p185 = por %p183, %p184
    %p186 = scmp.ne.s32.totalorder %s175, %s178
    %p187 = scmp.eq.s32.totalorder %s18, 1
    %p188 = por %p186, %p187
    %p189 = scmp.ne.s32.totalorder %s178, %s179
    %p190 = scmp.eq.s32.totalorder %s18, 0
    %p191 = por %p189, %p190
    %p192 = scmp.ne.s32.totalorder %s178, %s179
    %p193 = scmp.eq.s32.totalorder %s19, 1
    %p194 = por %p192, %p193
    %p196 = scmp.ne.s32.totalorder %s179, %s195
    %p197 = scmp.eq.s32.totalorder %s19, 0
    %p198 = por %p196, %p197
    %p199 = scmp.le.s32.totalorder 1, %s13
    %p200 = scmp.lt.s32.totalorder %s13, 3
    %p201 = pnand %p199, %p200
    %p202 = pneg %p201
    // Predicated region
    $region9: #{tpu_custom_call.1} parent=5 // pred_check
      _
    $region10: #{tpu_custom_call.1} parent=5 // pred_check_branch
      %204 = sbr.rel (%p201) target = $region12
    $region11: #{tpu_custom_call.1} parent=5 // pred_region
      %s205 = ssub.s32 %s13, 1
      // Predicated region
      $region13: #{tpu_custom_call.1} parent=11 // pred_check
        %p206 = pneg %p60
      $region14: #{tpu_custom_call.1} parent=11 // pred_check_branch
        %208 = sbr.rel (%p206) target = $region16
      $region15: #{tpu_custom_call.1} parent=11 // pred_region
        _
      $region16: #{tpu_custom_call.1} parent=11 // pred_fallthru
        _
      // Predicated region
      $region17: #{tpu_custom_call.1} parent=11 // pred_check
        %p209 = pneg %p81
      $region18: #{tpu_custom_call.1} parent=11 // pred_check_branch
        %211 = sbr.rel (%p209) target = $region20
      $region19: #{tpu_custom_call.1} parent=11 // pred_region
        _
      $region20: #{tpu_custom_call.1} parent=11 // pred_fallthru
        _
      // Predicated region
      $region21: #{tpu_custom_call.1} parent=11 // pred_check
        %p212 = pneg %p102
      $region22: #{tpu_custom_call.1} parent=11 // pred_check_branch
        %214 = sbr.rel (%p212) target = $region24
      $region23: #{tpu_custom_call.1} parent=11 // pred_region
        _
      $region24: #{tpu_custom_call.1} parent=11 // pred_fallthru
        _
      // Predicated region
      $region25: #{tpu_custom_call.1} parent=11 // pred_check
        %p215 = pneg %p123
      $region26: #{tpu_custom_call.1} parent=11 // pred_check_branch
        %217 = sbr.rel (%p215) target = $region28
      $region27: #{tpu_custom_call.1} parent=11 // pred_region
        _
      $region28: #{tpu_custom_call.1} parent=11 // pred_fallthru
        _
      // Predicated region
      $region29: #{tpu_custom_call.1} parent=11 // pred_check
        %p218 = pneg %p144
      $region30: #{tpu_custom_call.1} parent=11 // pred_check_branch
        %220 = sbr.rel (%p218) target = $region32
      $region31: #{tpu_custom_call.1} parent=11 // pred_region
        _
      $region32: #{tpu_custom_call.1} parent=11 // pred_fallthru
        _
      // Predicated region
      $region33: #{tpu_custom_call.1} parent=11 // pred_check
        %p221 = pneg %p165
      $region34: #{tpu_custom_call.1} parent=11 // pred_check_branch
        %223 = sbr.rel (%p221) target = $region36
      $region35: #{tpu_custom_call.1} parent=11 // pred_region
        _
      $region36: #{tpu_custom_call.1} parent=11 // pred_fallthru
        _
    $region12: #{tpu_custom_call.1} parent=5 // pred_fallthru
      _
    %p224 = scmp.lt.s32.totalorder %s13, 2
    // Predicated region
    $region37: #{tpu_custom_call.1} parent=5 // pred_check
      %p225 = pneg %p224
    $region38: #{tpu_custom_call.1} parent=5 // pred_check_branch
      %227 = sbr.rel (%p225) target = $region40
    $region39: #{tpu_custom_call.1} parent=5 // pred_region
      // Predicated region
      $region41: #{tpu_custom_call.1} parent=39 // pred_check
        %p228 = pneg %p33
      $region42: #{tpu_custom_call.1} parent=39 // pred_check_branch
        %230 = sbr.rel (%p228) target = $region44
      $region43: #{tpu_custom_call.1} parent=39 // pred_region
        %s231 = smul.u32 64, %s13
        %p232 = scmp.lt.s32.totalorder %s231, 127
        %s233 = scalar_select %p232, %s231, 127
        %s234 = smul.addr %s233, 8
        %s235 = scalar_lea.vmem %s0, %s234
        %s236 = smul.u32 64, %s13
      $region44: #{tpu_custom_call.1} parent=39 // pred_fallthru
        _
    $region40: #{tpu_custom_call.1} parent=5 // pred_fallthru
      _
    %p237 = scmp.le.s32.totalorder 1, %s13
    %p238 = scmp.lt.s32.totalorder %s13, 3
    %p239 = pnand %p237, %p238
    %p240 = pneg %p239
    // Predicated region
    $region45: #{tpu_custom_call.1} parent=5 // pred_check
      _
    $region46: #{tpu_custom_call.1} parent=5 // pred_check_branch
      %242 = sbr.rel (%p239) target = $region48
    $region47: #{tpu_custom_call.1} parent=5 // pred_region
      %s243 = ssub.s32 %s13, 1
      %s244 = smul.u32 64, %s18
      %p245 = scmp.lt.s32.totalorder %s244, 127
      %s246 = scalar_select %p245, %s244, 127
      %s247 = smul.addr %s246, 8
      %s248 = scalar_lea.vmem %s0, %s247
      %p249 = pneg %p39
      %p250 = pneg %p36
      %p251 = pneg %p60
      %p252 = pneg %p57
      %p253 = pneg %p81
      %p254 = pneg %p78
      %p255 = pneg %p102
      %p256 = pneg %p99
      %p257 = pneg %p123
      %p258 = pneg %p120
      %p259 = pneg %p144
      %p260 = pneg %p141
      %p261 = pneg %p165
      %p262 = pneg %p162
      %p263 = pneg %p191
      %p264 = pneg %p188
      %s265 = smul.u32 64, %s18
      %p266 = scmp.lt.s32.totalorder %s265, 127
      %s267 = scalar_select %p266, %s265, 127
      %s268 = smul.addr %s267, 8
      %s269 = scalar_lea.vmem %s7, %s268
      %s270 = smul.u32 64, %s18
      %p271 = scmp.lt.s32.totalorder %s270, 127
      %s272 = scalar_select %p271, %s270, 127
      %s273 = smul.addr %s272, 8
      %s274 = scalar_lea.vmem %s0, %s273
      %s275 = smul.u32 64, %s18
      %s276 = smul.u32 64, %s18
      %p277 = scmp.lt.s32.totalorder %s276, 127
      %s278 = scalar_select %p277, %s276, 127
      %s279 = smul.addr %s278, 8
      %s280 = scalar_lea.vmem %s7, %s279
      %s281 = smul.u32 64, %s18
      %v283 = vld [vmem:[%s274] sm:$0xff]
      %v284 = vld [vmem:[%s274 + $0x8] sm:$0xff]
      %v285 = vld [vmem:[%s274 + $0x10] sm:$0xff]
      %v286 = vld [vmem:[%s274 + $0x18] sm:$0xff]
      %v287 = vld [vmem:[%s274 + $0x20] sm:$0xff]
      %v288 = vld [vmem:[%s274 + $0x28] sm:$0xff]
      %v289 = vld [vmem:[%s274 + $0x30] sm:$0xff]
      %v290 = vld [vmem:[%s274 + $0x38] sm:$0xff]
      %v291 = vld [vmem:[%s274 + $0x40] sm:$0xff]
      %v292 = vld [vmem:[%s274 + $0x48] sm:$0xff]
      %v293 = vld [vmem:[%s274 + $0x50] sm:$0xff]
      %v294 = vld [vmem:[%s274 + $0x58] sm:$0xff]
      %v295 = vld [vmem:[%s274 + $0x60] sm:$0xff]
      %v296 = vld [vmem:[%s274 + $0x68] sm:$0xff]
      %v297 = vld [vmem:[%s274 + $0x70] sm:$0xff]
      %v298 = vld [vmem:[%s274 + $0x78] sm:$0xff]
      %v299 = vld [vmem:[%s274 + $0x80] sm:$0xff]
      %v300 = vld [vmem:[%s274 + $0x88] sm:$0xff]
      %v301 = vld [vmem:[%s274 + $0x90] sm:$0xff]
      %v302 = vld [vmem:[%s274 + $0x98] sm:$0xff]
      %v303 = vld [vmem:[%s274 + $0xa0] sm:$0xff]
      %v304 = vld [vmem:[%s274 + $0xa8] sm:$0xff]
      %v305 = vld [vmem:[%s274 + $0xb0] sm:$0xff]
      %v306 = vld [vmem:[%s274 + $0xb8] sm:$0xff]
      %v307 = vld [vmem:[%s274 + $0xc0] sm:$0xff]
      %v308 = vld [vmem:[%s274 + $0xc8] sm:$0xff]
      %v309 = vld [vmem:[%s274 + $0xd0] sm:$0xff]
      %v310 = vld [vmem:[%s274 + $0xd8] sm:$0xff]
      %v311 = vld [vmem:[%s274 + $0xe0] sm:$0xff]
      %v312 = vld [vmem:[%s274 + $0xe8] sm:$0xff]
      %v313 = vld [vmem:[%s274 + $0xf0] sm:$0xff]
      %v314 = vld [vmem:[%s274 + $0xf8] sm:$0xff]
      %v315 = vld [vmem:[%s274 + $0x100] sm:$0xff]
      %v316 = vld [vmem:[%s274 + $0x108] sm:$0xff]
      %v317 = vld [vmem:[%s274 + $0x110] sm:$0xff]
      %v318 = vld [vmem:[%s274 + $0x118] sm:$0xff]
      %v319 = vld [vmem:[%s274 + $0x120] sm:$0xff]
      %v320 = vld [vmem:[%s274 + $0x128] sm:$0xff]
      %v321 = vld [vmem:[%s274 + $0x130] sm:$0xff]
      %v322 = vld [vmem:[%s274 + $0x138] sm:$0xff]
      %v323 = vld [vmem:[%s274 + $0x140] sm:$0xff]
      %v324 = vld [vmem:[%s274 + $0x148] sm:$0xff]
      %v325 = vld [vmem:[%s274 + $0x150] sm:$0xff]
      %v326 = vld [vmem:[%s274 + $0x158] sm:$0xff]
      %v327 = vld [vmem:[%s274 + $0x160] sm:$0xff]
      %v328 = vld [vmem:[%s274 + $0x168] sm:$0xff]
      %v329 = vld [vmem:[%s274 + $0x170] sm:$0xff]
      %v330 = vld [vmem:[%s274 + $0x178] sm:$0xff]
      %v331 = vld [vmem:[%s274 + $0x180] sm:$0xff]
      %v332 = vld [vmem:[%s274 + $0x188] sm:$0xff]
      %v333 = vld [vmem:[%s274 + $0x190] sm:$0xff]
      %v334 = vld [vmem:[%s274 + $0x198] sm:$0xff]
      %v335 = vld [vmem:[%s274 + $0x1a0] sm:$0xff]
      %v336 = vld [vmem:[%s274 + $0x1a8] sm:$0xff]
      %v337 = vld [vmem:[%s274 + $0x1b0] sm:$0xff]
      %v338 = vld [vmem:[%s274 + $0x1b8] sm:$0xff]
      %v339 = vld [vmem:[%s274 + $0x1c0] sm:$0xff]
      %v340 = vld [vmem:[%s274 + $0x1c8] sm:$0xff]
      %v341 = vld [vmem:[%s274 + $0x1d0] sm:$0xff]
      %v342 = vld [vmem:[%s274 + $0x1d8] sm:$0xff]
      %v343 = vld [vmem:[%s274 + $0x1e0] sm:$0xff]
      %v344 = vld [vmem:[%s274 + $0x1e8] sm:$0xff]
      %v345 = vld [vmem:[%s274 + $0x1f0] sm:$0xff]
      %v346 = vld [vmem:[%s274 + $0x1f8] sm:$0xff]
      %v347 = vpack.c.bf16 %v284, %v283
      %v348 = vpack.c.bf16 %v286, %v285
      %v349 = vpack.c.bf16 %v288, %v287
      %v350 = vpack.c.bf16 %v290, %v289
      %v351 = vpack.c.bf16 %v292, %v291
      %v352 = vpack.c.bf16 %v294, %v293
      %v353 = vpack.c.bf16 %v296, %v295
      %v354 = vpack.c.bf16 %v298, %v297
      %v355 = vpack.c.bf16 %v300, %v299
      %v356 = vpack.c.bf16 %v302, %v301
      %v357 = vpack.c.bf16 %v304, %v303
      %v358 = vpack.c.bf16 %v306, %v305
      %v359 = vpack.c.bf16 %v308, %v307
      %v360 = vpack.c.bf16 %v310, %v309
      %v361 = vpack.c.bf16 %v312, %v311
      %v362 = vpack.c.bf16 %v314, %v313
      %v363 = vpack.c.bf16 %v316, %v315
      %v364 = vpack.c.bf16 %v318, %v317
      %v365 = vpack.c.bf16 %v320, %v319
      %v366 = vpack.c.bf16 %v322, %v321
      %v367 = vpack.c.bf16 %v324, %v323
      %v368 = vpack.c.bf16 %v326, %v325
      %v369 = vpack.c.bf16 %v328, %v327
      %v370 = vpack.c.bf16 %v330, %v329
      %v371 = vpack.c.bf16 %v332, %v331
      %v372 = vpack.c.bf16 %v334, %v333
      %v373 = vpack.c.bf16 %v336, %v335
      %v374 = vpack.c.bf16 %v338, %v337
      %v375 = vpack.c.bf16 %v340, %v339
      %v376 = vpack.c.bf16 %v342, %v341
      %v377 = vpack.c.bf16 %v344, %v343
      %v378 = vpack.c.bf16 %v346, %v345
      %v379 = vld [vmem:[%s1] sm:$0x3]
      %v380 = vld [vmem:[%s2] sm:$0x1]
      %v382 = vperm.slane %v380, 0
      %vm384 = vcmask 31744
      %v386 = vsel %vm384, %v347, 0
      %v389 = vsel %vm384, %v348, 0
      %v392 = vsel %vm384, %v349, 0
      %v395 = vsel %vm384, %v350, 0
      %v398 = vsel %vm384, %v351, 0
      %v401 = vsel %vm384, %v352, 0
      %v404 = vsel %vm384, %v353, 0
      %v407 = vsel %vm384, %v354, 0
      %v410 = vsel %vm384, %v355, 0
      %v413 = vsel %vm384, %v356, 0
      %v416 = vsel %vm384, %v357, 0
      %v419 = vsel %vm384, %v358, 0
      %v422 = vsel %vm384, %v359, 0
      %v425 = vsel %vm384, %v360, 0
      %v428 = vsel %vm384, %v361, 0
      %v431 = vsel %vm384, %v362, 0
      %v434 = vsel %vm384, %v363, 0
      %v437 = vsel %vm384, %v364, 0
      %v440 = vsel %vm384, %v365, 0
      %v443 = vsel %vm384, %v366, 0
      %v446 = vsel %vm384, %v367, 0
      %v449 = vsel %vm384, %v368, 0
      %v452 = vsel %vm384, %v369, 0
      %v455 = vsel %vm384, %v370, 0
      %v458 = vsel %vm384, %v371, 0
      %v461 = vsel %vm384, %v372, 0
      %v464 = vsel %vm384, %v373, 0
      %v467 = vsel %vm384, %v374, 0
      %v470 = vsel %vm384, %v375, 0
      %v473 = vsel %vm384, %v376, 0
      %v476 = vsel %vm384, %v377, 0
      %v479 = vsel %vm384, %v378, 0
      %vm481 = vcmask 1041408
      %v483 = vsel %vm481, %v379, 0
      %485 = vmatpush.bf16.msra.mxu0 0
      %486 = vmatpush.bf16.msra.mxu0 0
      %487 = vmatpush.bf16.msra.mxu0 0
      %488 = vmatpush.bf16.msra.mxu0 0
      %489 = vmatpush.bf16.msra.mxu0 0
      %490 = vmatpush.bf16.msra.mxu0 0
      %491 = vmatpush.bf16.msra.mxu0 0
      %492 = vmatpush.bf16.msra.mxu0 %v483
      %493 = vmatmul.bf16.gmra.mxu0 %v386
      %v494 = vpop.f32.mrf.mxu0
      %v495 = vadd.f32 %v382, %v494
      %v496 = vpop.f32.mrf.mxu0
      %v497 = vadd.f32 %v382, %v496
      %498 = vmatmul.bf16.gmra.mxu0 %v389
      %v499 = vpop.f32.mrf.mxu0
      %v500 = vadd.f32 %v382, %v499
      %v501 = vpop.f32.mrf.mxu0
      %v502 = vadd.f32 %v382, %v501
      %503 = vmatmul.bf16.gmra.mxu0 %v392
      %v504 = vpop.f32.mrf.mxu0
      %v505 = vadd.f32 %v382, %v504
      %v506 = vpop.f32.mrf.mxu0
      %v507 = vadd.f32 %v382, %v506
      %508 = vmatmul.bf16.gmra.mxu0 %v395
      %v509 = vpop.f32.mrf.mxu0
      %v510 = vadd.f32 %v382, %v509
      %v511 = vpop.f32.mrf.mxu0
      %v512 = vadd.f32 %v382, %v511
      %513 = vmatmul.bf16.gmra.mxu0 %v398
      %v514 = vpop.f32.mrf.mxu0
      %v515 = vadd.f32 %v382, %v514
      %v516 = vpop.f32.mrf.mxu0
      %v517 = vadd.f32 %v382, %v516
      %518 = vmatmul.bf16.gmra.mxu0 %v401
      %v519 = vpop.f32.mrf.mxu0
      %v520 = vadd.f32 %v382, %v519
      %v521 = vpop.f32.mrf.mxu0
      %v522 = vadd.f32 %v382, %v521
      %523 = vmatmul.bf16.gmra.mxu0 %v404
      %v524 = vpop.f32.mrf.mxu0
      %v525 = vadd.f32 %v382, %v524
      %v526 = vpop.f32.mrf.mxu0
      %v527 = vadd.f32 %v382, %v526
      %528 = vmatmul.bf16.gmra.mxu0 %v407
      %v529 = vpop.f32.mrf.mxu0
      %v530 = vadd.f32 %v382, %v529
      %v531 = vpop.f32.mrf.mxu0
      %v532 = vadd.f32 %v382, %v531
      %533 = vmatmul.bf16.gmra.mxu0 %v410
      %v534 = vpop.f32.mrf.mxu0
      %v535 = vadd.f32 %v382, %v534
      %v536 = vpop.f32.mrf.mxu0
      %v537 = vadd.f32 %v382, %v536
      %538 = vmatmul.bf16.gmra.mxu0 %v413
      %v539 = vpop.f32.mrf.mxu0
      %v540 = vadd.f32 %v382, %v539
      %v541 = vpop.f32.mrf.mxu0
      %v542 = vadd.f32 %v382, %v541
      %543 = vmatmul.bf16.gmra.mxu0 %v416
      %v544 = vpop.f32.mrf.mxu0
      %v545 = vadd.f32 %v382, %v544
      %v546 = vpop.f32.mrf.mxu0
      %v547 = vadd.f32 %v382, %v546
      %548 = vmatmul.bf16.gmra.mxu0 %v419
      %v549 = vpop.f32.mrf.mxu0
      %v550 = vadd.f32 %v382, %v549
      %v551 = vpop.f32.mrf.mxu0
      %v552 = vadd.f32 %v382, %v551
      %553 = vmatmul.bf16.gmra.mxu0 %v422
      %v554 = vpop.f32.mrf.mxu0
      %v555 = vadd.f32 %v382, %v554
      %v556 = vpop.f32.mrf.mxu0
      %v557 = vadd.f32 %v382, %v556
      %558 = vmatmul.bf16.gmra.mxu0 %v425
      %v559 = vpop.f32.mrf.mxu0
      %v560 = vadd.f32 %v382, %v559
      %v561 = vpop.f32.mrf.mxu0
      %v562 = vadd.f32 %v382, %v561
      %563 = vmatmul.bf16.gmra.mxu0 %v428
      %v564 = vpop.f32.mrf.mxu0
      %v565 = vadd.f32 %v382, %v564
      %v566 = vpop.f32.mrf.mxu0
      %v567 = vadd.f32 %v382, %v566
      %568 = vmatmul.bf16.gmra.mxu0 %v431
      %v569 = vpop.f32.mrf.mxu0
      %v570 = vadd.f32 %v382, %v569
      %v571 = vpop.f32.mrf.mxu0
      %v572 = vadd.f32 %v382, %v571
      %573 = vmatmul.bf16.gmra.mxu0 %v434
      %v574 = vpop.f32.mrf.mxu0
      %v575 = vadd.f32 %v382, %v574
      %v576 = vpop.f32.mrf.mxu0
      %v577 = vadd.f32 %v382, %v576
      %578 = vmatmul.bf16.gmra.mxu0 %v437
      %v579 = vpop.f32.mrf.mxu0
      %v580 = vadd.f32 %v382, %v579
      %v581 = vpop.f32.mrf.mxu0
      %v582 = vadd.f32 %v382, %v581
      %583 = vmatmul.bf16.gmra.mxu0 %v440
      %v584 = vpop.f32.mrf.mxu0
      %v585 = vadd.f32 %v382, %v584
      %v586 = vpop.f32.mrf.mxu0
      %v587 = vadd.f32 %v382, %v586
      %588 = vmatmul.bf16.gmra.mxu0 %v443
      %v589 = vpop.f32.mrf.mxu0
      %v590 = vadd.f32 %v382, %v589
      %v591 = vpop.f32.mrf.mxu0
      %v592 = vadd.f32 %v382, %v591
      %593 = vmatmul.bf16.gmra.mxu0 %v446
      %v594 = vpop.f32.mrf.mxu0
      %v595 = vadd.f32 %v382, %v594
      %v596 = vpop.f32.mrf.mxu0
      %v597 = vadd.f32 %v382, %v596
      %598 = vmatmul.bf16.gmra.mxu0 %v449
      %v599 = vpop.f32.mrf.mxu0
      %v600 = vadd.f32 %v382, %v599
      %v601 = vpop.f32.mrf.mxu0
      %v602 = vadd.f32 %v382, %v601
      %603 = vmatmul.bf16.gmra.mxu0 %v452
      %v604 = vpop.f32.mrf.mxu0
      %v605 = vadd.f32 %v382, %v604
      %v606 = vpop.f32.mrf.mxu0
      %v607 = vadd.f32 %v382, %v606
      %608 = vmatmul.bf16.gmra.mxu0 %v455
      %v609 = vpop.f32.mrf.mxu0
      %v610 = vadd.f32 %v382, %v609
      %v611 = vpop.f32.mrf.mxu0
      %v612 = vadd.f32 %v382, %v611
      %613 = vmatmul.bf16.gmra.mxu0 %v458
      %v614 = vpop.f32.mrf.mxu0
      %v615 = vadd.f32 %v382, %v614
      %v616 = vpop.f32.mrf.mxu0
      %v617 = vadd.f32 %v382, %v616
      %618 = vmatmul.bf16.gmra.mxu0 %v461
      %v619 = vpop.f32.mrf.mxu0
      %v620 = vadd.f32 %v382, %v619
      %v621 = vpop.f32.mrf.mxu0
      %v622 = vadd.f32 %v382, %v621
      %623 = vmatmul.bf16.gmra.mxu0 %v464
      %v624 = vpop.f32.mrf.mxu0
      %v625 = vadd.f32 %v382, %v624
      %v626 = vpop.f32.mrf.mxu0
      %v627 = vadd.f32 %v382, %v626
      %628 = vmatmul.bf16.gmra.mxu0 %v467
      %v629 = vpop.f32.mrf.mxu0
      %v630 = vadd.f32 %v382, %v629
      %v631 = vpop.f32.mrf.mxu0
      %v632 = vadd.f32 %v382, %v631
      %633 = vmatmul.bf16.gmra.mxu0 %v470
      %v634 = vpop.f32.mrf.mxu0
      %v635 = vadd.f32 %v382, %v634
      %v636 = vpop.f32.mrf.mxu0
      %v637 = vadd.f32 %v382, %v636
      %638 = vmatmul.bf16.gmra.mxu0 %v473
      %v639 = vpop.f32.mrf.mxu0
      %v640 = vadd.f32 %v382, %v639
      %v641 = vpop.f32.mrf.mxu0
      %v642 = vadd.f32 %v382, %v641
      %643 = vmatmul.bf16.gmra.mxu0 %v476
      %v644 = vpop.f32.mrf.mxu0
      %v645 = vadd.f32 %v382, %v644
      %v646 = vpop.f32.mrf.mxu0
      %v647 = vadd.f32 %v382, %v646
      %648 = vmatmul.bf16.gmra.mxu0 %v479
      %v649 = vpop.f32.mrf.mxu0
      %v650 = vadd.f32 %v382, %v649
      %v651 = vpop.f32.mrf.mxu0
      %v652 = vadd.f32 %v382, %v651
      %653 = vdwg.mxu0
      %v654 = vmax.f32 %v495, 0.0
      %v655 = vmax.f32 %v497, 0.0
      %v656 = vmax.f32 %v500, 0.0
      %v657 = vmax.f32 %v502, 0.0
      %v658 = vmax.f32 %v505, 0.0
      %v659 = vmax.f32 %v507, 0.0
      %v660 = vmax.f32 %v510, 0.0
      %v661 = vmax.f32 %v512, 0.0
      %v662 = vmax.f32 %v515, 0.0
      %v663 = vmax.f32 %v517, 0.0
      %v664 = vmax.f32 %v520, 0.0
      %v665 = vmax.f32 %v522, 0.0
      %v666 = vmax.f32 %v525, 0.0
      %v667 = vmax.f32 %v527, 0.0
      %v668 = vmax.f32 %v530, 0.0
      %v669 = vmax.f32 %v532, 0.0
      %v670 = vmax.f32 %v535, 0.0
      %v671 = vmax.f32 %v537, 0.0
      %v672 = vmax.f32 %v540, 0.0
      %v673 = vmax.f32 %v542, 0.0
      %v674 = vmax.f32 %v545, 0.0
      %v675 = vmax.f32 %v547, 0.0
      %v676 = vmax.f32 %v550, 0.0
      %v677 = vmax.f32 %v552, 0.0
      %v678 = vmax.f32 %v555, 0.0
      %v679 = vmax.f32 %v557, 0.0
      %v680 = vmax.f32 %v560, 0.0
      %v681 = vmax.f32 %v562, 0.0
      %v682 = vmax.f32 %v565, 0.0
      %v683 = vmax.f32 %v567, 0.0
      %v684 = vmax.f32 %v570, 0.0
      %v685 = vmax.f32 %v572, 0.0
      %v686 = vmax.f32 %v575, 0.0
      %v687 = vmax.f32 %v577, 0.0
      %v688 = vmax.f32 %v580, 0.0
      %v689 = vmax.f32 %v582, 0.0
      %v690 = vmax.f32 %v585, 0.0
      %v691 = vmax.f32 %v587, 0.0
      %v692 = vmax.f32 %v590, 0.0
      %v693 = vmax.f32 %v592, 0.0
      %v694 = vmax.f32 %v595, 0.0
      %v695 = vmax.f32 %v597, 0.0
      %v696 = vmax.f32 %v600, 0.0
      %v697 = vmax.f32 %v602, 0.0
      %v698 = vmax.f32 %v605, 0.0
      %v699 = vmax.f32 %v607, 0.0
      %v700 = vmax.f32 %v610, 0.0
      %v701 = vmax.f32 %v612, 0.0
      %v702 = vmax.f32 %v615, 0.0
      %v703 = vmax.f32 %v617, 0.0
      %v704 = vmax.f32 %v620, 0.0
      %v705 = vmax.f32 %v622, 0.0
      %v706 = vmax.f32 %v625, 0.0
      %v707 = vmax.f32 %v627, 0.0
      %v708 = vmax.f32 %v630, 0.0
      %v709 = vmax.f32 %v632, 0.0
      %v710 = vmax.f32 %v635, 0.0
      %v711 = vmax.f32 %v637, 0.0
      %v712 = vmax.f32 %v640, 0.0
      %v713 = vmax.f32 %v642, 0.0
      %v714 = vmax.f32 %v645, 0.0
      %v715 = vmax.f32 %v647, 0.0
      %v716 = vmax.f32 %v650, 0.0
      %v717 = vmax.f32 %v652, 0.0
      %v718 = vpack.c.bf16 %v655, %v654
      %v719 = vpack.c.bf16 %v657, %v656
      %v720 = vpack.c.bf16 %v659, %v658
      %v721 = vpack.c.bf16 %v661, %v660
      %v722 = vpack.c.bf16 %v663, %v662
      %v723 = vpack.c.bf16 %v665, %v664
      %v724 = vpack.c.bf16 %v667, %v666
      %v725 = vpack.c.bf16 %v669, %v668
      %v726 = vpack.c.bf16 %v671, %v670
      %v727 = vpack.c.bf16 %v673, %v672
      %v728 = vpack.c.bf16 %v675, %v674
      %v729 = vpack.c.bf16 %v677, %v676
      %v730 = vpack.c.bf16 %v679, %v678
      %v731 = vpack.c.bf16 %v681, %v680
      %v732 = vpack.c.bf16 %v683, %v682
      %v733 = vpack.c.bf16 %v685, %v684
      %v734 = vpack.c.bf16 %v687, %v686
      %v735 = vpack.c.bf16 %v689, %v688
      %v736 = vpack.c.bf16 %v691, %v690
      %v737 = vpack.c.bf16 %v693, %v692
      %v738 = vpack.c.bf16 %v695, %v694
      %v739 = vpack.c.bf16 %v697, %v696
      %v740 = vpack.c.bf16 %v699, %v698
      %v741 = vpack.c.bf16 %v701, %v700
      %v742 = vpack.c.bf16 %v703, %v702
      %v743 = vpack.c.bf16 %v705, %v704
      %v744 = vpack.c.bf16 %v707, %v706
      %v745 = vpack.c.bf16 %v709, %v708
      %v746 = vpack.c.bf16 %v711, %v710
      %v747 = vpack.c.bf16 %v713, %v712
      %v748 = vpack.c.bf16 %v715, %v714
      %v749 = vpack.c.bf16 %v717, %v716
      %v750 = vld [vmem:[%s3] sm:$0xf]
      %v751 = vld [vmem:[%s3 + $0x4] sm:$0xf]
      %v752 = vld [vmem:[%s3 + $0x8] sm:$0xf]
      %v753 = vld [vmem:[%s3 + $0xc] sm:$0xf]
      %v754 = vld [vmem:[%s3 + $0x10] sm:$0xf]
      %v755 = vld [vmem:[%s3 + $0x14] sm:$0xf]
      %v756 = vld [vmem:[%s3 + $0x18] sm:$0xf]
      %v757 = vld [vmem:[%s3 + $0x1c] sm:$0xf]
      %v758 = vld [vmem:[%s4] sm:$0x1]
      %v760 = vperm.slane %v758, 0
      %v770 = vunpack.c.l.b16 %v750
      %v771 = vunpack.c.l.b16 %v751
      %v772 = vunpack.c.l.b16 %v752
      %v773 = vunpack.c.l.b16 %v753
      %v774 = vunpack.c.l.b16 %v754
      %v775 = vunpack.c.l.b16 %v755
      %v776 = vunpack.c.l.b16 %v756
      %v777 = vunpack.c.l.b16 %v757
      %v778 = vpack.c.b16 %v771, %v770
      %v779 = vpack.c.b16 %v773, %v772
      %v780 = vpack.c.b16 %v775, %v774
      %v781 = vpack.c.b16 %v777, %v776
      %vm786 = vcmask 523264
      %v788 = vsel %vm786, %v718, 0
      %v791 = vsel %vm786, %v719, 0
      %v794 = vsel %vm786, %v720, 0
      %v797 = vsel %vm786, %v721, 0
      %v800 = vsel %vm786, %v722, 0
      %v803 = vsel %vm786, %v723, 0
      %v806 = vsel %vm786, %v724, 0
      %v809 = vsel %vm786, %v725, 0
      %v812 = vsel %vm786, %v726, 0
      %v815 = vsel %vm786, %v727, 0
      %v818 = vsel %vm786, %v728, 0
      %v821 = vsel %vm786, %v729, 0
      %v824 = vsel %vm786, %v730, 0
      %v827 = vsel %vm786, %v731, 0
      %v830 = vsel %vm786, %v732, 0
      %v833 = vsel %vm786, %v733, 0
      %v836 = vsel %vm786, %v734, 0
      %v839 = vsel %vm786, %v735, 0
      %v842 = vsel %vm786, %v736, 0
      %v845 = vsel %vm786, %v737, 0
      %v848 = vsel %vm786, %v738, 0
      %v851 = vsel %vm786, %v739, 0
      %v854 = vsel %vm786, %v740, 0
      %v857 = vsel %vm786, %v741, 0
      %v860 = vsel %vm786, %v742, 0
      %v863 = vsel %vm786, %v743, 0
      %v866 = vsel %vm786, %v744, 0
      %v869 = vsel %vm786, %v745, 0
      %v872 = vsel %vm786, %v746, 0
      %v875 = vsel %vm786, %v747, 0
      %v878 = vsel %vm786, %v748, 0
      %v881 = vsel %vm786, %v749, 0
      %883 = vmatpush.bf16.msra.mxu0 0
      %884 = vmatpush.bf16.msra.mxu0 0
      %885 = vmatpush.bf16.msra.mxu0 0
      %886 = vmatpush.bf16.msra.mxu0 0
      %887 = vmatpush.bf16.msra.mxu0 %v781
      %888 = vmatpush.bf16.msra.mxu0 %v780
      %889 = vmatpush.bf16.msra.mxu0 %v779
      %890 = vmatpush.bf16.msra.mxu0 %v778
      %891 = vmatmul.bf16.gmra.mxu0 %v788
      %v892 = vpop.f32.mrf.mxu0
      %v893 = vadd.f32 %v760, %v892
      %v894 = vpop.f32.mrf.mxu0
      %v895 = vadd.f32 %v760, %v894
      %896 = vmatmul.bf16.gmra.mxu0 %v791
      %v897 = vpop.f32.mrf.mxu0
      %v898 = vadd.f32 %v760, %v897
      %v899 = vpop.f32.mrf.mxu0
      %v900 = vadd.f32 %v760, %v899
      %901 = vmatmul.bf16.gmra.mxu0 %v794
      %v902 = vpop.f32.mrf.mxu0
      %v903 = vadd.f32 %v760, %v902
      %v904 = vpop.f32.mrf.mxu0
      %v905 = vadd.f32 %v760, %v904
      %906 = vmatmul.bf16.gmra.mxu0 %v797
      %v907 = vpop.f32.mrf.mxu0
      %v908 = vadd.f32 %v760, %v907
      %v909 = vpop.f32.mrf.mxu0
      %v910 = vadd.f32 %v760, %v909
      %911 = vmatmul.bf16.gmra.mxu0 %v800
      %v912 = vpop.f32.mrf.mxu0
      %v913 = vadd.f32 %v760, %v912
      %v914 = vpop.f32.mrf.mxu0
      %v915 = vadd.f32 %v760, %v914
      %916 = vmatmul.bf16.gmra.mxu0 %v803
      %v917 = vpop.f32.mrf.mxu0
      %v918 = vadd.f32 %v760, %v917
      %v919 = vpop.f32.mrf.mxu0
      %v920 = vadd.f32 %v760, %v919
      %921 = vmatmul.bf16.gmra.mxu0 %v806
      %v922 = vpop.f32.mrf.mxu0
      %v923 = vadd.f32 %v760, %v922
      %v924 = vpop.f32.mrf.mxu0
      %v925 = vadd.f32 %v760, %v924
      %926 = vmatmul.bf16.gmra.mxu0 %v809
      %v927 = vpop.f32.mrf.mxu0
      %v928 = vadd.f32 %v760, %v927
      %v929 = vpop.f32.mrf.mxu0
      %v930 = vadd.f32 %v760, %v929
      %931 = vmatmul.bf16.gmra.mxu0 %v812
      %v932 = vpop.f32.mrf.mxu0
      %v933 = vadd.f32 %v760, %v932
      %v934 = vpop.f32.mrf.mxu0
      %v935 = vadd.f32 %v760, %v934
      %936 = vmatmul.bf16.gmra.mxu0 %v815
      %v937 = vpop.f32.mrf.mxu0
      %v938 = vadd.f32 %v760, %v937
      %v939 = vpop.f32.mrf.mxu0
      %v940 = vadd.f32 %v760, %v939
      %941 = vmatmul.bf16.gmra.mxu0 %v818
      %v942 = vpop.f32.mrf.mxu0
      %v943 = vadd.f32 %v760, %v942
      %v944 = vpop.f32.mrf.mxu0
      %v945 = vadd.f32 %v760, %v944
      %946 = vmatmul.bf16.gmra.mxu0 %v821
      %v947 = vpop.f32.mrf.mxu0
      %v948 = vadd.f32 %v760, %v947
      %v949 = vpop.f32.mrf.mxu0
      %v950 = vadd.f32 %v760, %v949
      %951 = vmatmul.bf16.gmra.mxu0 %v824
      %v952 = vpop.f32.mrf.mxu0
      %v953 = vadd.f32 %v760, %v952
      %v954 = vpop.f32.mrf.mxu0
      %v955 = vadd.f32 %v760, %v954
      %956 = vmatmul.bf16.gmra.mxu0 %v827
      %v957 = vpop.f32.mrf.mxu0
      %v958 = vadd.f32 %v760, %v957
      %v959 = vpop.f32.mrf.mxu0
      %v960 = vadd.f32 %v760, %v959
      %961 = vmatmul.bf16.gmra.mxu0 %v830
      %v962 = vpop.f32.mrf.mxu0
      %v963 = vadd.f32 %v760, %v962
      %v964 = vpop.f32.mrf.mxu0
      %v965 = vadd.f32 %v760, %v964
      %966 = vmatmul.bf16.gmra.mxu0 %v833
      %v967 = vpop.f32.mrf.mxu0
      %v968 = vadd.f32 %v760, %v967
      %v969 = vpop.f32.mrf.mxu0
      %v970 = vadd.f32 %v760, %v969
      %971 = vmatmul.bf16.gmra.mxu0 %v836
      %v972 = vpop.f32.mrf.mxu0
      %v973 = vadd.f32 %v760, %v972
      %v974 = vpop.f32.mrf.mxu0
      %v975 = vadd.f32 %v760, %v974
      %976 = vmatmul.bf16.gmra.mxu0 %v839
      %v977 = vpop.f32.mrf.mxu0
      %v978 = vadd.f32 %v760, %v977
      %v979 = vpop.f32.mrf.mxu0
      %v980 = vadd.f32 %v760, %v979
      %981 = vmatmul.bf16.gmra.mxu0 %v842
      %v982 = vpop.f32.mrf.mxu0
      %v983 = vadd.f32 %v760, %v982
      %v984 = vpop.f32.mrf.mxu0
      %v985 = vadd.f32 %v760, %v984
      %986 = vmatmul.bf16.gmra.mxu0 %v845
      %v987 = vpop.f32.mrf.mxu0
      %v988 = vadd.f32 %v760, %v987
      %v989 = vpop.f32.mrf.mxu0
      %v990 = vadd.f32 %v760, %v989
      %991 = vmatmul.bf16.gmra.mxu0 %v848
      %v992 = vpop.f32.mrf.mxu0
      %v993 = vadd.f32 %v760, %v992
      %v994 = vpop.f32.mrf.mxu0
      %v995 = vadd.f32 %v760, %v994
      %996 = vmatmul.bf16.gmra.mxu0 %v851
      %v997 = vpop.f32.mrf.mxu0
      %v998 = vadd.f32 %v760, %v997
      %v999 = vpop.f32.mrf.mxu0
      %v1000 = vadd.f32 %v760, %v999
      %1001 = vmatmul.bf16.gmra.mxu0 %v854
      %v1002 = vpop.f32.mrf.mxu0
      %v1003 = vadd.f32 %v760, %v1002
      %v1004 = vpop.f32.mrf.mxu0
      %v1005 = vadd.f32 %v760, %v1004
      %1006 = vmatmul.bf16.gmra.mxu0 %v857
      %v1007 = vpop.f32.mrf.mxu0
      %v1008 = vadd.f32 %v760, %v1007
      %v1009 = vpop.f32.mrf.mxu0
      %v1010 = vadd.f32 %v760, %v1009
      %1011 = vmatmul.bf16.gmra.mxu0 %v860
      %v1012 = vpop.f32.mrf.mxu0
      %v1013 = vadd.f32 %v760, %v1012
      %v1014 = vpop.f32.mrf.mxu0
      %v1015 = vadd.f32 %v760, %v1014
      %1016 = vmatmul.bf16.gmra.mxu0 %v863
      %v1017 = vpop.f32.mrf.mxu0
      %v1018 = vadd.f32 %v760, %v1017
      %v1019 = vpop.f32.mrf.mxu0
      %v1020 = vadd.f32 %v760, %v1019
      %1021 = vmatmul.bf16.gmra.mxu0 %v866
      %v1022 = vpop.f32.mrf.mxu0
      %v1023 = vadd.f32 %v760, %v1022
      %v1024 = vpop.f32.mrf.mxu0
      %v1025 = vadd.f32 %v760, %v1024
      %1026 = vmatmul.bf16.gmra.mxu0 %v869
      %v1027 = vpop.f32.mrf.mxu0
      %v1028 = vadd.f32 %v760, %v1027
      %v1029 = vpop.f32.mrf.mxu0
      %v1030 = vadd.f32 %v760, %v1029
      %1031 = vmatmul.bf16.gmra.mxu0 %v872
      %v1032 = vpop.f32.mrf.mxu0
      %v1033 = vadd.f32 %v760, %v1032
      %v1034 = vpop.f32.mrf.mxu0
      %v1035 = vadd.f32 %v760, %v1034
      %1036 = vmatmul.bf16.gmra.mxu0 %v875
      %v1037 = vpop.f32.mrf.mxu0
      %v1038 = vadd.f32 %v760, %v1037
      %v1039 = vpop.f32.mrf.mxu0
      %v1040 = vadd.f32 %v760, %v1039
      %1041 = vmatmul.bf16.gmra.mxu0 %v878
      %v1042 = vpop.f32.mrf.mxu0
      %v1043 = vadd.f32 %v760, %v1042
      %v1044 = vpop.f32.mrf.mxu0
      %v1045 = vadd.f32 %v760, %v1044
      %1046 = vmatmul.bf16.gmra.mxu0 %v881
      %v1047 = vpop.f32.mrf.mxu0
      %v1048 = vadd.f32 %v760, %v1047
      %v1049 = vpop.f32.mrf.mxu0
      %v1050 = vadd.f32 %v760, %v1049
      %1051 = vdwg.mxu0
      %v1052 = vmax.f32 %v893, 0.0
      %v1053 = vmax.f32 %v895, 0.0
      %v1054 = vmax.f32 %v898, 0.0
      %v1055 = vmax.f32 %v900, 0.0
      %v1056 = vmax.f32 %v903, 0.0
      %v1057 = vmax.f32 %v905, 0.0
      %v1058 = vmax.f32 %v908, 0.0
      %v1059 = vmax.f32 %v910, 0.0
      %v1060 = vmax.f32 %v913, 0.0
      %v1061 = vmax.f32 %v915, 0.0
      %v1062 = vmax.f32 %v918, 0.0
      %v1063 = vmax.f32 %v920, 0.0
      %v1064 = vmax.f32 %v923, 0.0
      %v1065 = vmax.f32 %v925, 0.0
      %v1066 = vmax.f32 %v928, 0.0
      %v1067 = vmax.f32 %v930, 0.0
      %v1068 = vmax.f32 %v933, 0.0
      %v1069 = vmax.f32 %v935, 0.0
      %v1070 = vmax.f32 %v938, 0.0
      %v1071 = vmax.f32 %v940, 0.0
      %v1072 = vmax.f32 %v943, 0.0
      %v1073 = vmax.f32 %v945, 0.0
      %v1074 = vmax.f32 %v948, 0.0
      %v1075 = vmax.f32 %v950, 0.0
      %v1076 = vmax.f32 %v953, 0.0
      %v1077 = vmax.f32 %v955, 0.0
      %v1078 = vmax.f32 %v958, 0.0
      %v1079 = vmax.f32 %v960, 0.0
      %v1080 = vmax.f32 %v963, 0.0
      %v1081 = vmax.f32 %v965, 0.0
      %v1082 = vmax.f32 %v968, 0.0
      %v1083 = vmax.f32 %v970, 0.0
      %v1084 = vmax.f32 %v973, 0.0
      %v1085 = vmax.f32 %v975, 0.0
      %v1086 = vmax.f32 %v978, 0.0
      %v1087 = vmax.f32 %v980, 0.0
      %v1088 = vmax.f32 %v983, 0.0
      %v1089 = vmax.f32 %v985, 0.0
      %v1090 = vmax.f32 %v988, 0.0
      %v1091 = vmax.f32 %v990, 0.0
      %v1092 = vmax.f32 %v993, 0.0
      %v1093 = vmax.f32 %v995, 0.0
      %v1094 = vmax.f32 %v998, 0.0
      %v1095 = vmax.f32 %v1000, 0.0
      %v1096 = vmax.f32 %v1003, 0.0
      %v1097 = vmax.f32 %v1005, 0.0
      %v1098 = vmax.f32 %v1008, 0.0
      %v1099 = vmax.f32 %v1010, 0.0
      %v1100 = vmax.f32 %v1013, 0.0
      %v1101 = vmax.f32 %v1015, 0.0
      %v1102 = vmax.f32 %v1018, 0.0
      %v1103 = vmax.f32 %v1020, 0.0
      %v1104 = vmax.f32 %v1023, 0.0
      %v1105 = vmax.f32 %v1025, 0.0
      %v1106 = vmax.f32 %v1028, 0.0
      %v1107 = vmax.f32 %v1030, 0.0
      %v1108 = vmax.f32 %v1033, 0.0
      %v1109 = vmax.f32 %v1035, 0.0
      %v1110 = vmax.f32 %v1038, 0.0
      %v1111 = vmax.f32 %v1040, 0.0
      %v1112 = vmax.f32 %v1043, 0.0
      %v1113 = vmax.f32 %v1045, 0.0
      %v1114 = vmax.f32 %v1048, 0.0
      %v1115 = vmax.f32 %v1050, 0.0
      %v1116 = vpack.c.bf16 %v1053, %v1052
      %v1117 = vpack.c.bf16 %v1055, %v1054
      %v1118 = vpack.c.bf16 %v1057, %v1056
      %v1119 = vpack.c.bf16 %v1059, %v1058
      %v1120 = vpack.c.bf16 %v1061, %v1060
      %v1121 = vpack.c.bf16 %v1063, %v1062
      %v1122 = vpack.c.bf16 %v1065, %v1064
      %v1123 = vpack.c.bf16 %v1067, %v1066
      %v1124 = vpack.c.bf16 %v1069, %v1068
      %v1125 = vpack.c.bf16 %v1071, %v1070
      %v1126 = vpack.c.bf16 %v1073, %v1072
      %v1127 = vpack.c.bf16 %v1075, %v1074
      %v1128 = vpack.c.bf16 %v1077, %v1076
      %v1129 = vpack.c.bf16 %v1079, %v1078
      %v1130 = vpack.c.bf16 %v1081, %v1080
      %v1131 = vpack.c.bf16 %v1083, %v1082
      %v1132 = vpack.c.bf16 %v1085, %v1084
      %v1133 = vpack.c.bf16 %v1087, %v1086
      %v1134 = vpack.c.bf16 %v1089, %v1088
      %v1135 = vpack.c.bf16 %v1091, %v1090
      %v1136 = vpack.c.bf16 %v1093, %v1092
      %v1137 = vpack.c.bf16 %v1095, %v1094
      %v1138 = vpack.c.bf16 %v1097, %v1096
      %v1139 = vpack.c.bf16 %v1099, %v1098
      %v1140 = vpack.c.bf16 %v1101, %v1100
      %v1141 = vpack.c.bf16 %v1103, %v1102
      %v1142 = vpack.c.bf16 %v1105, %v1104
      %v1143 = vpack.c.bf16 %v1107, %v1106
      %v1144 = vpack.c.bf16 %v1109, %v1108
      %v1145 = vpack.c.bf16 %v1111, %v1110
      %v1146 = vpack.c.bf16 %v1113, %v1112
      %v1147 = vpack.c.bf16 %v1115, %v1114
      %v1148 = vld [vmem:[%s5] sm:$0xf]
      %v1149 = vld [vmem:[%s5 + $0x4] sm:$0xf]
      %v1150 = vld [vmem:[%s5 + $0x8] sm:$0xf]
      %v1151 = vld [vmem:[%s5 + $0xc] sm:$0xf]
      %v1152 = vld [vmem:[%s5 + $0x10] sm:$0xf]
      %v1153 = vld [vmem:[%s5 + $0x14] sm:$0xf]
      %v1154 = vld [vmem:[%s5 + $0x18] sm:$0xf]
      %v1155 = vld [vmem:[%s5 + $0x1c] sm:$0xf]
      %v1156 = vld [vmem:[%s6] sm:$0x1]
      %v1158 = vperm.slane %v1156, 0
      %v1168 = vunpack.c.l.b16 %v1148
      %v1169 = vunpack.c.l.b16 %v1149
      %v1170 = vunpack.c.l.b16 %v1150
      %v1171 = vunpack.c.l.b16 %v1151
      %v1172 = vunpack.c.l.b16 %v1152
      %v1173 = vunpack.c.l.b16 %v1153
      %v1174 = vunpack.c.l.b16 %v1154
      %v1175 = vunpack.c.l.b16 %v1155
      %v1176 = vpack.c.b16 %v1169, %v1168
      %v1177 = vpack.c.b16 %v1171, %v1170
      %v1178 = vpack.c.b16 %v1173, %v1172
      %v1179 = vpack.c.b16 %v1175, %v1174
      %v1185 = vsel %vm786, %v1116, 0
      %v1188 = vsel %vm786, %v1117, 0
      %v1191 = vsel %vm786, %v1118, 0
      %v1194 = vsel %vm786, %v1119, 0
      %v1197 = vsel %vm786, %v1120, 0
      %v1200 = vsel %vm786, %v1121, 0
      %v1203 = vsel %vm786, %v1122, 0
      %v1206 = vsel %vm786, %v1123, 0
      %v1209 = vsel %vm786, %v1124, 0
      %v1212 = vsel %vm786, %v1125, 0
      %v1215 = vsel %vm786, %v1126, 0
      %v1218 = vsel %vm786, %v1127, 0
      %v1221 = vsel %vm786, %v1128, 0
      %v1224 = vsel %vm786, %v1129, 0
      %v1227 = vsel %vm786, %v1130, 0
      %v1230 = vsel %vm786, %v1131, 0
      %v1233 = vsel %vm786, %v1132, 0
      %v1236 = vsel %vm786, %v1133, 0
      %v1239 = vsel %vm786, %v1134, 0
      %v1242 = vsel %vm786, %v1135, 0
      %v1245 = vsel %vm786, %v1136, 0
      %v1248 = vsel %vm786, %v1137, 0
      %v1251 = vsel %vm786, %v1138, 0
      %v1254 = vsel %vm786, %v1139, 0
      %v1257 = vsel %vm786, %v1140, 0
      %v1260 = vsel %vm786, %v1141, 0
      %v1263 = vsel %vm786, %v1142, 0
      %v1266 = vsel %vm786, %v1143, 0
      %v1269 = vsel %vm786, %v1144, 0
      %v1272 = vsel %vm786, %v1145, 0
      %v1275 = vsel %vm786, %v1146, 0
      %v1278 = vsel %vm786, %v1147, 0
      %1280 = vmatpush.bf16.msra.mxu0 0
      %1281 = vmatpush.bf16.msra.mxu0 0
      %1282 = vmatpush.bf16.msra.mxu0 0
      %1283 = vmatpush.bf16.msra.mxu0 0
      %1284 = vmatpush.bf16.msra.mxu0 %v1179
      %1285 = vmatpush.bf16.msra.mxu0 %v1178
      %1286 = vmatpush.bf16.msra.mxu0 %v1177
      %1287 = vmatpush.bf16.msra.mxu0 %v1176
      %1288 = vmatmul.bf16.gmra.mxu0 %v1185
      %v1289 = vpop.f32.mrf.mxu0
      %v1290 = vadd.f32 %v1158, %v1289
      %v1291 = vpop.f32.mrf.mxu0
      %v1292 = vadd.f32 %v1158, %v1291
      %1293 = vmatmul.bf16.gmra.mxu0 %v1188
      %v1294 = vpop.f32.mrf.mxu0
      %v1295 = vadd.f32 %v1158, %v1294
      %v1296 = vpop.f32.mrf.mxu0
      %v1297 = vadd.f32 %v1158, %v1296
      %1298 = vmatmul.bf16.gmra.mxu0 %v1191
      %v1299 = vpop.f32.mrf.mxu0
      %v1300 = vadd.f32 %v1158, %v1299
      %v1301 = vpop.f32.mrf.mxu0
      %v1302 = vadd.f32 %v1158, %v1301
      %1303 = vmatmul.bf16.gmra.mxu0 %v1194
      %v1304 = vpop.f32.mrf.mxu0
      %v1305 = vadd.f32 %v1158, %v1304
      %v1306 = vpop.f32.mrf.mxu0
      %v1307 = vadd.f32 %v1158, %v1306
      %1308 = vmatmul.bf16.gmra.mxu0 %v1197
      %v1309 = vpop.f32.mrf.mxu0
      %v1310 = vadd.f32 %v1158, %v1309
      %v1311 = vpop.f32.mrf.mxu0
      %v1312 = vadd.f32 %v1158, %v1311
      %1313 = vmatmul.bf16.gmra.mxu0 %v1200
      %v1314 = vpop.f32.mrf.mxu0
      %v1315 = vadd.f32 %v1158, %v1314
      %v1316 = vpop.f32.mrf.mxu0
      %v1317 = vadd.f32 %v1158, %v1316
      %1318 = vmatmul.bf16.gmra.mxu0 %v1203
      %v1319 = vpop.f32.mrf.mxu0
      %v1320 = vadd.f32 %v1158, %v1319
      %v1321 = vpop.f32.mrf.mxu0
      %v1322 = vadd.f32 %v1158, %v1321
      %1323 = vmatmul.bf16.gmra.mxu0 %v1206
      %v1324 = vpop.f32.mrf.mxu0
      %v1325 = vadd.f32 %v1158, %v1324
      %v1326 = vpop.f32.mrf.mxu0
      %v1327 = vadd.f32 %v1158, %v1326
      %1328 = vmatmul.bf16.gmra.mxu0 %v1209
      %v1329 = vpop.f32.mrf.mxu0
      %v1330 = vadd.f32 %v1158, %v1329
      %v1331 = vpop.f32.mrf.mxu0
      %v1332 = vadd.f32 %v1158, %v1331
      %1333 = vmatmul.bf16.gmra.mxu0 %v1212
      %v1334 = vpop.f32.mrf.mxu0
      %v1335 = vadd.f32 %v1158, %v1334
      %v1336 = vpop.f32.mrf.mxu0
      %v1337 = vadd.f32 %v1158, %v1336
      %1338 = vmatmul.bf16.gmra.mxu0 %v1215
      %v1339 = vpop.f32.mrf.mxu0
      %v1340 = vadd.f32 %v1158, %v1339
      %v1341 = vpop.f32.mrf.mxu0
      %v1342 = vadd.f32 %v1158, %v1341
      %1343 = vmatmul.bf16.gmra.mxu0 %v1218
      %v1344 = vpop.f32.mrf.mxu0
      %v1345 = vadd.f32 %v1158, %v1344
      %v1346 = vpop.f32.mrf.mxu0
      %v1347 = vadd.f32 %v1158, %v1346
      %1348 = vmatmul.bf16.gmra.mxu0 %v1221
      %v1349 = vpop.f32.mrf.mxu0
      %v1350 = vadd.f32 %v1158, %v1349
      %v1351 = vpop.f32.mrf.mxu0
      %v1352 = vadd.f32 %v1158, %v1351
      %1353 = vmatmul.bf16.gmra.mxu0 %v1224
      %v1354 = vpop.f32.mrf.mxu0
      %v1355 = vadd.f32 %v1158, %v1354
      %v1356 = vpop.f32.mrf.mxu0
      %v1357 = vadd.f32 %v1158, %v1356
      %1358 = vmatmul.bf16.gmra.mxu0 %v1227
      %v1359 = vpop.f32.mrf.mxu0
      %v1360 = vadd.f32 %v1158, %v1359
      %v1361 = vpop.f32.mrf.mxu0
      %v1362 = vadd.f32 %v1158, %v1361
      %1363 = vmatmul.bf16.gmra.mxu0 %v1230
      %v1364 = vpop.f32.mrf.mxu0
      %v1365 = vadd.f32 %v1158, %v1364
      %v1366 = vpop.f32.mrf.mxu0
      %v1367 = vadd.f32 %v1158, %v1366
      %1368 = vmatmul.bf16.gmra.mxu0 %v1233
      %v1369 = vpop.f32.mrf.mxu0
      %v1370 = vadd.f32 %v1158, %v1369
      %v1371 = vpop.f32.mrf.mxu0
      %v1372 = vadd.f32 %v1158, %v1371
      %1373 = vmatmul.bf16.gmra.mxu0 %v1236
      %v1374 = vpop.f32.mrf.mxu0
      %v1375 = vadd.f32 %v1158, %v1374
      %v1376 = vpop.f32.mrf.mxu0
      %v1377 = vadd.f32 %v1158, %v1376
      %1378 = vmatmul.bf16.gmra.mxu0 %v1239
      %v1379 = vpop.f32.mrf.mxu0
      %v1380 = vadd.f32 %v1158, %v1379
      %v1381 = vpop.f32.mrf.mxu0
      %v1382 = vadd.f32 %v1158, %v1381
      %1383 = vmatmul.bf16.gmra.mxu0 %v1242
      %v1384 = vpop.f32.mrf.mxu0
      %v1385 = vadd.f32 %v1158, %v1384
      %v1386 = vpop.f32.mrf.mxu0
      %v1387 = vadd.f32 %v1158, %v1386
      %1388 = vmatmul.bf16.gmra.mxu0 %v1245
      %v1389 = vpop.f32.mrf.mxu0
      %v1390 = vadd.f32 %v1158, %v1389
      %v1391 = vpop.f32.mrf.mxu0
      %v1392 = vadd.f32 %v1158, %v1391
      %1393 = vmatmul.bf16.gmra.mxu0 %v1248
      %v1394 = vpop.f32.mrf.mxu0
      %v1395 = vadd.f32 %v1158, %v1394
      %v1396 = vpop.f32.mrf.mxu0
      %v1397 = vadd.f32 %v1158, %v1396
      %1398 = vmatmul.bf16.gmra.mxu0 %v1251
      %v1399 = vpop.f32.mrf.mxu0
      %v1400 = vadd.f32 %v1158, %v1399
      %v1401 = vpop.f32.mrf.mxu0
      %v1402 = vadd.f32 %v1158, %v1401
      %1403 = vmatmul.bf16.gmra.mxu0 %v1254
      %v1404 = vpop.f32.mrf.mxu0
      %v1405 = vadd.f32 %v1158, %v1404
      %v1406 = vpop.f32.mrf.mxu0
      %v1407 = vadd.f32 %v1158, %v1406
      %1408 = vmatmul.bf16.gmra.mxu0 %v1257
      %v1409 = vpop.f32.mrf.mxu0
      %v1410 = vadd.f32 %v1158, %v1409
      %v1411 = vpop.f32.mrf.mxu0
      %v1412 = vadd.f32 %v1158, %v1411
      %1413 = vmatmul.bf16.gmra.mxu0 %v1260
      %v1414 = vpop.f32.mrf.mxu0
      %v1415 = vadd.f32 %v1158, %v1414
      %v1416 = vpop.f32.mrf.mxu0
      %v1417 = vadd.f32 %v1158, %v1416
      %1418 = vmatmul.bf16.gmra.mxu0 %v1263
      %v1419 = vpop.f32.mrf.mxu0
      %v1420 = vadd.f32 %v1158, %v1419
      %v1421 = vpop.f32.mrf.mxu0
      %v1422 = vadd.f32 %v1158, %v1421
      %1423 = vmatmul.bf16.gmra.mxu0 %v1266
      %v1424 = vpop.f32.mrf.mxu0
      %v1425 = vadd.f32 %v1158, %v1424
      %v1426 = vpop.f32.mrf.mxu0
      %v1427 = vadd.f32 %v1158, %v1426
      %1428 = vmatmul.bf16.gmra.mxu0 %v1269
      %v1429 = vpop.f32.mrf.mxu0
      %v1430 = vadd.f32 %v1158, %v1429
      %v1431 = vpop.f32.mrf.mxu0
      %v1432 = vadd.f32 %v1158, %v1431
      %1433 = vmatmul.bf16.gmra.mxu0 %v1272
      %v1434 = vpop.f32.mrf.mxu0
      %v1435 = vadd.f32 %v1158, %v1434
      %v1436 = vpop.f32.mrf.mxu0
      %v1437 = vadd.f32 %v1158, %v1436
      %1438 = vmatmul.bf16.gmra.mxu0 %v1275
      %v1439 = vpop.f32.mrf.mxu0
      %v1440 = vadd.f32 %v1158, %v1439
      %v1441 = vpop.f32.mrf.mxu0
      %v1442 = vadd.f32 %v1158, %v1441
      %1443 = vmatmul.bf16.gmra.mxu0 %v1278
      %v1444 = vpop.f32.mrf.mxu0
      %v1445 = vadd.f32 %v1158, %v1444
      %v1446 = vpop.f32.mrf.mxu0
      %v1447 = vadd.f32 %v1158, %v1446
      %1448 = vdwg.mxu0
      %vm1449 = vcmask 15360
      %1450 = vst.msk [vmem:[%s280] sm:$0xff] %vm1449, %v1290
      %1451 = vst.msk [vmem:[%s280 + $0x8] sm:$0xff] %vm1449, %v1292
      %1452 = vst.msk [vmem:[%s280 + $0x10] sm:$0xff] %vm1449, %v1295
      %1453 = vst.msk [vmem:[%s280 + $0x18] sm:$0xff] %vm1449, %v1297
      %1454 = vst.msk [vmem:[%s280 + $0x20] sm:$0xff] %vm1449, %v1300
      %1455 = vst.msk [vmem:[%s280 + $0x28] sm:$0xff] %vm1449, %v1302
      %1456 = vst.msk [vmem:[%s280 + $0x30] sm:$0xff] %vm1449, %v1305
      %1457 = vst.msk [vmem:[%s280 + $0x38] sm:$0xff] %vm1449, %v1307
      %1458 = vst.msk [vmem:[%s280 + $0x40] sm:$0xff] %vm1449, %v1310
      %1459 = vst.msk [vmem:[%s280 + $0x48] sm:$0xff] %vm1449, %v1312
      %1460 = vst.msk [vmem:[%s280 + $0x50] sm:$0xff] %vm1449, %v1315
      %1461 = vst.msk [vmem:[%s280 + $0x58] sm:$0xff] %vm1449, %v1317
      %1462 = vst.msk [vmem:[%s280 + $0x60] sm:$0xff] %vm1449, %v1320
      %1463 = vst.msk [vmem:[%s280 + $0x68] sm:$0xff] %vm1449, %v1322
      %1464 = vst.msk [vmem:[%s280 + $0x70] sm:$0xff] %vm1449, %v1325
      %1465 = vst.msk [vmem:[%s280 + $0x78] sm:$0xff] %vm1449, %v1327
      %1466 = vst.msk [vmem:[%s280 + $0x80] sm:$0xff] %vm1449, %v1330
      %1467 = vst.msk [vmem:[%s280 + $0x88] sm:$0xff] %vm1449, %v1332
      %1468 = vst.msk [vmem:[%s280 + $0x90] sm:$0xff] %vm1449, %v1335
      %1469 = vst.msk [vmem:[%s280 + $0x98] sm:$0xff] %vm1449, %v1337
      %1470 = vst.msk [vmem:[%s280 + $0xa0] sm:$0xff] %vm1449, %v1340
      %1471 = vst.msk [vmem:[%s280 + $0xa8] sm:$0xff] %vm1449, %v1342
      %1472 = vst.msk [vmem:[%s280 + $0xb0] sm:$0xff] %vm1449, %v1345
      %1473 = vst.msk [vmem:[%s280 + $0xb8] sm:$0xff] %vm1449, %v1347
      %1474 = vst.msk [vmem:[%s280 + $0xc0] sm:$0xff] %vm1449, %v1350
      %1475 = vst.msk [vmem:[%s280 + $0xc8] sm:$0xff] %vm1449, %v1352
      %1476 = vst.msk [vmem:[%s280 + $0xd0] sm:$0xff] %vm1449, %v1355
      %1477 = vst.msk [vmem:[%s280 + $0xd8] sm:$0xff] %vm1449, %v1357
      %1478 = vst.msk [vmem:[%s280 + $0xe0] sm:$0xff] %vm1449, %v1360
      %1479 = vst.msk [vmem:[%s280 + $0xe8] sm:$0xff] %vm1449, %v1362
      %1480 = vst.msk [vmem:[%s280 + $0xf0] sm:$0xff] %vm1449, %v1365
      %1481 = vst.msk [vmem:[%s280 + $0xf8] sm:$0xff] %vm1449, %v1367
      %1482 = vst.msk [vmem:[%s280 + $0x100] sm:$0xff] %vm1449, %v1370
      %1483 = vst.msk [vmem:[%s280 + $0x108] sm:$0xff] %vm1449, %v1372
      %1484 = vst.msk [vmem:[%s280 + $0x110] sm:$0xff] %vm1449, %v1375
      %1485 = vst.msk [vmem:[%s280 + $0x118] sm:$0xff] %vm1449, %v1377
      %1486 = vst.msk [vmem:[%s280 + $0x120] sm:$0xff] %vm1449, %v1380
      %1487 = vst.msk [vmem:[%s280 + $0x128] sm:$0xff] %vm1449, %v1382
      %1488 = vst.msk [vmem:[%s280 + $0x130] sm:$0xff] %vm1449, %v1385
      %1489 = vst.msk [vmem:[%s280 + $0x138] sm:$0xff] %vm1449, %v1387
      %1490 = vst.msk [vmem:[%s280 + $0x140] sm:$0xff] %vm1449, %v1390
      %1491 = vst.msk [vmem:[%s280 + $0x148] sm:$0xff] %vm1449, %v1392
      %1492 = vst.msk [vmem:[%s280 + $0x150] sm:$0xff] %vm1449, %v1395
      %1493 = vst.msk [vmem:[%s280 + $0x158] sm:$0xff] %vm1449, %v1397
      %1494 = vst.msk [vmem:[%s280 + $0x160] sm:$0xff] %vm1449, %v1400
      %1495 = vst.msk [vmem:[%s280 + $0x168] sm:$0xff] %vm1449, %v1402
      %1496 = vst.msk [vmem:[%s280 + $0x170] sm:$0xff] %vm1449, %v1405
      %1497 = vst.msk [vmem:[%s280 + $0x178] sm:$0xff] %vm1449, %v1407
      %1498 = vst.msk [vmem:[%s280 + $0x180] sm:$0xff] %vm1449, %v1410
      %1499 = vst.msk [vmem:[%s280 + $0x188] sm:$0xff] %vm1449, %v1412
      %1500 = vst.msk [vmem:[%s280 + $0x190] sm:$0xff] %vm1449, %v1415
      %1501 = vst.msk [vmem:[%s280 + $0x198] sm:$0xff] %vm1449, %v1417
      %1502 = vst.msk [vmem:[%s280 + $0x1a0] sm:$0xff] %vm1449, %v1420
      %1503 = vst.msk [vmem:[%s280 + $0x1a8] sm:$0xff] %vm1449, %v1422
      %1504 = vst.msk [vmem:[%s280 + $0x1b0] sm:$0xff] %vm1449, %v1425
      %1505 = vst.msk [vmem:[%s280 + $0x1b8] sm:$0xff] %vm1449, %v1427
      %1506 = vst.msk [vmem:[%s280 + $0x1c0] sm:$0xff] %vm1449, %v1430
      %1507 = vst.msk [vmem:[%s280 + $0x1c8] sm:$0xff] %vm1449, %v1432
      %1508 = vst.msk [vmem:[%s280 + $0x1d0] sm:$0xff] %vm1449, %v1435
      %1509 = vst.msk [vmem:[%s280 + $0x1d8] sm:$0xff] %vm1449, %v1437
      %1510 = vst.msk [vmem:[%s280 + $0x1e0] sm:$0xff] %vm1449, %v1440
      %1511 = vst.msk [vmem:[%s280 + $0x1e8] sm:$0xff] %vm1449, %v1442
      %1512 = vst.msk [vmem:[%s280 + $0x1f0] sm:$0xff] %vm1449, %v1445
      %1513 = vst.msk [vmem:[%s280 + $0x1f8] sm:$0xff] %vm1449, %v1447
      %s1514 = smul.u32 64, %s18
      %p1515 = scmp.lt.s32.totalorder %s1514, 127
      %s1516 = scalar_select %p1515, %s1514, 127
      %s1517 = smul.addr %s1516, 8
      %s1518 = scalar_lea.vmem %s7, %s1517
      // Predicated region
      $region49: #{tpu_custom_call.1} parent=47 // pred_check
        %p1519 = pneg %p188
      $region50: #{tpu_custom_call.1} parent=47 // pred_check_branch
        %1521 = sbr.rel (%p1519) target = $region52
      $region51: #{tpu_custom_call.1} parent=47 // pred_region
        %s1522 = smul.u32 64, %s18
      $region52: #{tpu_custom_call.1} parent=47 // pred_fallthru
        _
    $region48: #{tpu_custom_call.1} parent=5 // pred_fallthru
      _
    %p1523 = scmp.le.s32.totalorder 2, %s13
    // Predicated region
    $region53: #{tpu_custom_call.1} parent=5 // pred_check
      %p1524 = pneg %p1523
    $region54: #{tpu_custom_call.1} parent=5 // pred_check_branch
      %1526 = sbr.rel (%p1524) target = $region56
    $region55: #{tpu_custom_call.1} parent=5 // pred_region
      %s1527 = ssub.s32 %s13, 2
      // Predicated region
      $region57: #{tpu_custom_call.1} parent=55 // pred_check
        %p1528 = pneg %p194
      $region58: #{tpu_custom_call.1} parent=55 // pred_check_branch
        %1530 = sbr.rel (%p1528) target = $region60
      $region59: #{tpu_custom_call.1} parent=55 // pred_region
        %s1531 = smul.u32 64, %s19
        %p1532 = scmp.lt.s32.totalorder %s1531, 127
        %s1533 = scalar_select %p1532, %s1531, 127
        %s1534 = smul.addr %s1533, 8
        %s1535 = scalar_lea.vmem %s7, %s1534
      $region60: #{tpu_custom_call.1} parent=55 // pred_fallthru
        _
    $region56: #{tpu_custom_call.1} parent=5 // pred_fallthru
      _
  $region6: #{tpu_custom_call.1} parent=0 // loop_footer
    %s17 = sadd.s32 1, %s13
  $region7: #{tpu_custom_call.1} parent=0 // loop_footer_branch
    %12 = sbr.rel target = $region3
  $region8: #{tpu_custom_call.1} parent=0 // loop_exit
    _

</llo_original>
